<compile_context>
chip_gen: v7x
topology: tpu7x:2x2x1
jax: 0.10.0
libtpu: 0.0.40
codegen_flags: <defaults>
</compile_context>

<pallas_src>
import functools
import math

import jax
import jax.numpy as jnp
from jax.experimental import pallas as pl
from jax.experimental.pallas import tpu as pltpu

STATE_DIM = 16
ACTION_DIM = 8
HIDDEN_SIZES = (64, 64)
BATCH = 16

LANE = 128               # TPU lane width: pad final layer outputs to this
MAX_SINGLE_TILE = 512    # below this, run the whole batch as one grid step
LARGE_TILE_B = 256       # batch tile once the batch is actually large


def _xavier_uniform(key, fan_in, fan_out, dtype=jnp.float32):
    # Matches nn.init.xavier_uniform_ (gain=1): U(-a, a), a = sqrt(6/(fan_in+fan_out))
    bound = math.sqrt(6.0 / (fan_in + fan_out))
    return jax.random.uniform(key, (fan_in, fan_out), dtype=dtype,
                              minval=-bound, maxval=bound)


def init_params(key):
    """Deterministic xavier init ('xavier' branch of initialize_weights);
    biases are zeroed, exactly as in the reference initializer.
    Weights are stored transposed as (in_features, out_features)."""
    k1, k2, k3 = jax.random.split(key, 3)
    w1 = _xavier_uniform(k1, STATE_DIM, HIDDEN_SIZES[0])
    b1 = jnp.zeros((1, HIDDEN_SIZES[0]), jnp.float32)
    w2 = _xavier_uniform(k2, HIDDEN_SIZES[0], HIDDEN_SIZES[1])
    b2 = jnp.zeros((1, HIDDEN_SIZES[1]), jnp.float32)
    wf = _xavier_uniform(k3, HIDDEN_SIZES[1], ACTION_DIM)
    bf = jnp.zeros((1, ACTION_DIM), jnp.float32)
    return w1, b1, w2, b2, wf, bf


def disc_policy_kernel(x_ref, w1_ref, b1_ref, w2_ref, b2_ref, wf_ref, bf_ref,
                       o_ref, *, compute_dtype):
    """Whole MLP + softmax for one batch tile, fully resident in VMEM.

    wf_ref/bf_ref are padded to LANE (128) output columns; the padded bias
    columns hold -1e30 so their softmax probability is exactly 0 and the
    output store is lane-dense."""
    x = x_ref[...]

    def mm(a, w_ref):
        # Optionally feed the MXU bf16 operands; always accumulate in f32.
        return jnp.dot(a.astype(compute_dtype),
                       w_ref[...].astype(compute_dtype),
                       preferred_element_type=jnp.float32)

    # hidden layer 1 (MXU) + tanh (EUP)
    h = jnp.tanh(mm(x, w1_ref) + b1_ref[...])
    # hidden layer 2
    h = jnp.tanh(mm(h, w2_ref) + b2_ref[...])
    # final linear -> (tile_b, LANE) padded logits
    logits = mm(h, wf_ref) + bf_ref[...]

    # numerically-stable softmax over the (padded) action axis
    m = jnp.max(logits, axis=-1, keepdims=True)
    e = jnp.exp(logits - m)
    denom = jnp.sum(e, axis=-1, keepdims=True)
    o_ref[...] = e * pl.reciprocal(denom, approx=False)


def disc_policy_forward(x, params, *, use_bf16_matmul=False):
    w1, b1, w2, b2, wf, bf = params
    B, state_dim = x.shape
    n_act = wf.shape[1]

    # --- lane-dense output: pad the final layer out to a multiple of 128 ---
    n_pad = max(LANE, ((n_act + LANE - 1) // LANE) * LANE)
    wf_p = jnp.zeros((wf.shape[0], n_pad), wf.dtype).at[:, :n_act].set(wf)
    bf_p = jnp.full((1, n_pad), -1e30, bf.dtype).at[:, :n_act].set(bf)

    # --- batch tiling: single grid step for small batches, 256-row tiles
    #     (parallel -> shards across TensorCores on v7x) for large ones ---
    tile_b = B if B <= MAX_SINGLE_TILE else LARGE_TILE_B
    padded_b = ((B + tile_b - 1) // tile_b) * tile_b
    x_in = x if padded_b == B else jnp.pad(x, ((0, padded_b - B), (0, 0)))
    grid = (padded_b // tile_b,)

    compute_dtype = jnp.bfloat16 if use_bf16_matmul else jnp.float32
    kernel = functools.partial(disc_policy_kernel,
                               compute_dtype=compute_dtype)

    # Parameters are tiny: stage each whole array into VMEM once
    # (no per-grid-step pipelining / double buffering).
    vmem_full = pl.BlockSpec(memory_space=pltpu.MemorySpace.VMEM)

    out = pl.pallas_call(
        kernel,
        out_shape=jax.ShapeDtypeStruct((padded_b, n_pad), jnp.float32),
        grid_spec=pltpu.PrefetchScalarGridSpec(
            num_scalar_prefetch=0,
            grid=grid,
            in_specs=[
                pl.BlockSpec((tile_b, state_dim), lambda i: (i, 0)),  # x tile
                vmem_full, vmem_full,   # w1, b1
                vmem_full, vmem_full,   # w2, b2
                vmem_full, vmem_full,   # wf (padded), bf (padded)
            ],
            out_specs=pl.BlockSpec((tile_b, n_pad), lambda i: (i, 0)),
        ),
        compiler_params=pltpu.CompilerParams(
            dimension_semantics=("parallel",)),
    )(x_in, w1, b1, w2, b2, wf_p, bf_p)

    # strip batch padding and lane padding
    return out[:B, :n_act]


def disc_policy_reference(x, params):
    """Pure-JAX f32 reference of the PyTorch forward."""
    w1, b1, w2, b2, wf, bf = params
    h = jnp.tanh(x @ w1 + b1)
    h = jnp.tanh(h @ w2 + b2)
    logits = h @ wf + bf
    return jax.nn.softmax(logits, axis=-1)


if __name__ == "__main__":
    key = jax.random.PRNGKey(0)
    k_param, k_x = jax.random.split(key)

    params = init_params(k_param)
    x = jax.random.normal(k_x, (BATCH, STATE_DIM), dtype=jnp.float32)

    ref = disc_policy_reference(x, params)

    # f32 MXU path (default): must match the f32 reference tightly.
    probs = disc_policy_forward(x, params)
    probs = jax.block_until_ready(probs)
    assert probs.shape == (BATCH, ACTION_DIM)
    assert jnp.allclose(jnp.sum(probs, axis=-1), 1.0, atol=1e-5)
    assert jnp.allclose(probs, ref, atol=1e-5, rtol=1e-5)

    # bf16 MXU-operand path (v6e/v7x large-batch optimization): f32 accumulate,
    # checked against the f32 reference at bf16-appropriate tolerance.
    probs_bf16 = disc_policy_forward(x, params, use_bf16_matmul=True)
    probs_bf16 = jax.block_until_ready(probs_bf16)
    assert jnp.allclose(jnp.sum(probs_bf16, axis=-1), 1.0, atol=1e-3)
    assert jnp.allclose(probs_bf16, ref, atol=2e-2, rtol=5e-2)

    print("KERNEL_OK")
</pallas_src>

<mosaic_0001>
module attributes {stable_mosaic.version = 11 : i64} {
  func.func @disc_policy_kernel(%arg0: i32, %arg1: memref<16x16xf32, #tpu.memory_space<vmem>>, %arg2: memref<16x64xf32, #tpu.memory_space<vmem>>, %arg3: memref<1x64xf32, #tpu.memory_space<vmem>>, %arg4: memref<64x64xf32, #tpu.memory_space<vmem>>, %arg5: memref<1x64xf32, #tpu.memory_space<vmem>>, %arg6: memref<64x128xf32, #tpu.memory_space<vmem>>, %arg7: memref<1x128xf32, #tpu.memory_space<vmem>>, %arg8: memref<16x128xf32, #tpu.memory_space<vmem>>) attributes {dimension_semantics = [#tpu.dimension_semantics<parallel>], iteration_bounds = array<i64: 1>, scalar_prefetch = 0 : i64, scratch_operands = 0 : i64, tpu.core_type = #tpu.core_type<tc>, window_params = [{transform_indices = @transform_0, window_bounds = array<i64: 16, 16>}, {pipeline_mode = #tpu.pipeline_mode<synchronous>, transform_indices = @transform_1, window_bounds = array<i64: 16, 64>}, {pipeline_mode = #tpu.pipeline_mode<synchronous>, transform_indices = @transform_2, window_bounds = array<i64: 1, 64>}, {pipeline_mode = #tpu.pipeline_mode<synchronous>, transform_indices = @transform_3, window_bounds = array<i64: 64, 64>}, {pipeline_mode = #tpu.pipeline_mode<synchronous>, transform_indices = @transform_4, window_bounds = array<i64: 1, 64>}, {pipeline_mode = #tpu.pipeline_mode<synchronous>, transform_indices = @transform_5, window_bounds = array<i64: 64, 128>}, {pipeline_mode = #tpu.pipeline_mode<synchronous>, transform_indices = @transform_6, window_bounds = array<i64: 1, 128>}, {transform_indices = @transform_7, window_bounds = array<i64: 16, 128>}]} {
    %c0 = arith.constant 0 : index
    %c0_0 = arith.constant 0 : index
    %0 = vector.load %arg1[%c0, %c0_0] : memref<16x16xf32, #tpu.memory_space<vmem>>, vector<16x16xf32>
    %c0_1 = arith.constant 0 : index
    %c0_2 = arith.constant 0 : index
    %1 = vector.load %arg2[%c0_1, %c0_2] : memref<16x64xf32, #tpu.memory_space<vmem>>, vector<16x64xf32>
    %cst = arith.constant dense<0.000000e+00> : vector<16x64xf32>
    %2 = tpu.matmul %0, %1, %cst {dimension_numbers = #tpu.dot_dimension_numbers<[1], [0], [0], [1], [0, 0, 1, 1], [], []>} : vector<16x16xf32>, vector<16x64xf32>, vector<16x64xf32> -> vector<16x64xf32>
    %c0_3 = arith.constant 0 : index
    %c0_4 = arith.constant 0 : index
    %3 = vector.load %arg3[%c0_3, %c0_4] : memref<1x64xf32, #tpu.memory_space<vmem>>, vector<1x64xf32>
    %4 = vector.broadcast %3 : vector<1x64xf32> to vector<16x64xf32>
    %5 = arith.addf %2, %4 : vector<16x64xf32>
    %6 = math.tanh %5 : vector<16x64xf32>
    %c0_5 = arith.constant 0 : index
    %c0_6 = arith.constant 0 : index
    %7 = vector.load %arg4[%c0_5, %c0_6] : memref<64x64xf32, #tpu.memory_space<vmem>>, vector<64x64xf32>
    %cst_7 = arith.constant dense<0.000000e+00> : vector<16x64xf32>
    %8 = tpu.matmul %6, %7, %cst_7 {dimension_numbers = #tpu.dot_dimension_numbers<[1], [0], [0], [1], [0, 0, 1, 1], [], []>} : vector<16x64xf32>, vector<64x64xf32>, vector<16x64xf32> -> vector<16x64xf32>
    %c0_8 = arith.constant 0 : index
    %c0_9 = arith.constant 0 : index
    %9 = vector.load %arg5[%c0_8, %c0_9] : memref<1x64xf32, #tpu.memory_space<vmem>>, vector<1x64xf32>
    %10 = vector.broadcast %9 : vector<1x64xf32> to vector<16x64xf32>
    %11 = arith.addf %8, %10 : vector<16x64xf32>
    %12 = math.tanh %11 : vector<16x64xf32>
    %c0_10 = arith.constant 0 : index
    %c0_11 = arith.constant 0 : index
    %13 = vector.load %arg6[%c0_10, %c0_11] : memref<64x128xf32, #tpu.memory_space<vmem>>, vector<64x128xf32>
    %cst_12 = arith.constant dense<0.000000e+00> : vector<16x128xf32>
    %14 = tpu.matmul %12, %13, %cst_12 {dimension_numbers = #tpu.dot_dimension_numbers<[1], [0], [0], [1], [0, 0, 1, 1], [], []>} : vector<16x64xf32>, vector<64x128xf32>, vector<16x128xf32> -> vector<16x128xf32>
    %c0_13 = arith.constant 0 : index
    %c0_14 = arith.constant 0 : index
    %15 = vector.load %arg7[%c0_13, %c0_14] : memref<1x128xf32, #tpu.memory_space<vmem>>, vector<1x128xf32>
    %16 = vector.broadcast %15 : vector<1x128xf32> to vector<16x128xf32>
    %17 = arith.addf %14, %16 : vector<16x128xf32>
    %cst_15 = arith.constant dense<0xFF800000> : vector<16xf32>
    %18 = vector.multi_reduction <maximumf>, %17, %cst_15 [1] : vector<16x128xf32> to vector<16xf32>
    %19 = vector.shape_cast %18 : vector<16xf32> to vector<16x1xf32>
    %20 = vector.broadcast %19 : vector<16x1xf32> to vector<16x128xf32>
    %21 = arith.subf %17, %20 : vector<16x128xf32>
    %22 = math.exp %21 : vector<16x128xf32>
    %cst_16 = arith.constant dense<0.000000e+00> : vector<16xf32>
    %23 = vector.multi_reduction <add>, %22, %cst_16 [1] : vector<16x128xf32> to vector<16xf32>
    %24 = vector.shape_cast %23 : vector<16xf32> to vector<16x1xf32>
    %25 = tpu.reciprocal %24 : vector<16x1xf32> -> vector<16x1xf32>
    %26 = vector.broadcast %25 : vector<16x1xf32> to vector<16x128xf32>
    %27 = arith.mulf %22, %26 : vector<16x128xf32>
    %c0_17 = arith.constant 0 : index
    %c0_18 = arith.constant 0 : index
    %28 = vector.load %arg8[%c0_17, %c0_18] : memref<16x128xf32, #tpu.memory_space<vmem>>, vector<16x128xf32>
    tpu.vector_store %arg8[%c0_17, %c0_18], %27 {strides = array<i32>} : memref<16x128xf32, #tpu.memory_space<vmem>>, vector<16x128xf32>,
    return
  }
  func.func @transform_0(%arg0: i32) -> (i32, i32) {
    %c0_i32 = arith.constant 0 : i32
    %c0_i32_0 = arith.constant 0 : i32
    return %arg0, %c0_i32 : i32, i32
  }
  func.func @transform_1(%arg0: i32) -> (i32, i32) {
    %c0_i32 = arith.constant 0 : i32
    %c0_i32_0 = arith.constant 0 : i32
    %c0_i32_1 = arith.constant 0 : i32
    return %c0_i32, %c0_i32_0 : i32, i32
  }
  func.func @transform_2(%arg0: i32) -> (i32, i32) {
    %c0_i32 = arith.constant 0 : i32
    %c0_i32_0 = arith.constant 0 : i32
    %c0_i32_1 = arith.constant 0 : i32
    return %c0_i32, %c0_i32_0 : i32, i32
  }
  func.func @transform_3(%arg0: i32) -> (i32, i32) {
    %c0_i32 = arith.constant 0 : i32
    %c0_i32_0 = arith.constant 0 : i32
    %c0_i32_1 = arith.constant 0 : i32
    return %c0_i32, %c0_i32_0 : i32, i32
  }
  func.func @transform_4(%arg0: i32) -> (i32, i32) {
    %c0_i32 = arith.constant 0 : i32
    %c0_i32_0 = arith.constant 0 : i32
    %c0_i32_1 = arith.constant 0 : i32
    return %c0_i32, %c0_i32_0 : i32, i32
  }
  func.func @transform_5(%arg0: i32) -> (i32, i32) {
    %c0_i32 = arith.constant 0 : i32
    %c0_i32_0 = arith.constant 0 : i32
    %c0_i32_1 = arith.constant 0 : i32
    return %c0_i32, %c0_i32_0 : i32, i32
  }
  func.func @transform_6(%arg0: i32) -> (i32, i32) {
    %c0_i32 = arith.constant 0 : i32
    %c0_i32_0 = arith.constant 0 : i32
    %c0_i32_1 = arith.constant 0 : i32
    return %c0_i32, %c0_i32_0 : i32, i32
  }
  func.func @transform_7(%arg0: i32) -> (i32, i32) {
    %c0_i32 = arith.constant 0 : i32
    %c0_i32_0 = arith.constant 0 : i32
    return %arg0, %c0_i32 : i32, i32
  }
}

</mosaic_0001>

<llo_original>
// kernel: tpu_custom_call.1
$region0: #{tpu_custom_call.1}
  #allocation0 [shape = 'u32[]', space=smem, size = 0x4, offset = 0x4, fixed_abs, tag = 'smem constant byte address 0x4 - core index']
  #allocation1 [shape = 'u32[144,128]{1,0:T(1,128)}', space=vmem, size = 0x12000, scoped, tag = 'internal scratch']
  %s0 = inlined_call_operand.hbm [shape: f32[16,16], index: 0, kind: input, shape index: {}]
  %s1 = inlined_call_operand.hbm [shape: f32[16,64], index: 1, kind: input, shape index: {}]
  %s2 = inlined_call_operand.vmem [shape: f32[1,64], index: 2, kind: input, shape index: {}]
  %s3 = inlined_call_operand.hbm [shape: f32[64,64], index: 3, kind: input, shape index: {}]
  %s4 = inlined_call_operand.vmem [shape: f32[1,64], index: 4, kind: input, shape index: {}]
  %s5 = inlined_call_operand.hbm [shape: f32[64,128], index: 5, kind: input, shape index: {}]
  %s6 = inlined_call_operand.vmem [shape: f32[1,128], index: 6, kind: input, shape index: {}]
  %s7 = inlined_call_operand.hbm [shape: f32[16,128], index: 7, kind: output, shape index: {}]
  %s8 = sld [smem:[#allocation0]]
  $region54: #{tpu_custom_call.1} parent=0
    _
  %s10 = ssub.s32 1, %s8
  %s11 = scalar_select 0, %s10, %s8
  $region1: #{tpu_custom_call.1} parent=0
    #allocation2 [shape = 'u8[8192]{0}', space=vmem, size = 0x2000, scoped, tag = 'input window, operand 0, single buffered']
    #allocation3 [shape = 's32[1]{0}', space=sflag, size = 0x4, scoped, tag = 'scoped memory for tpu_custom_call.1']
    #allocation4 [shape = 's32[1]{0}', space=sflag, size = 0x4, scoped, tag = 'scoped memory for tpu_custom_call.1']
    #allocation5 [shape = 'u8[8192]{0}', space=vmem, size = 0x2000, scoped, tag = 'input window, operand 1, single buffered']
    #allocation6 [shape = 's32[1]{0}', space=sflag, size = 0x4, scoped, tag = 'scoped memory for tpu_custom_call.1']
    #allocation7 [shape = 'u8[32768]{0}', space=vmem, size = 0x8000, scoped, tag = 'input window, operand 3, single buffered']
    #allocation8 [shape = 'u8[32768]{0}', space=vmem, size = 0x8000, scoped, tag = 'input window, operand 5, single buffered']
    #allocation9 [shape = 's32[1]{0}', space=sflag, size = 0x4, scoped, tag = 'scoped memory for tpu_custom_call.1']
    #allocation10 [shape = 'u8[8192]{0}', space=vmem, size = 0x2000, scoped, tag = 'output window, operand 0, single buffered']
    %12 = vsyncpa [#allocation3], 0
    %13 = vsyncpa [#allocation6], 0
    %14 = vsyncpa [#allocation9], 0
    %15 = vsyncpa [#allocation4], 0
    // Predicated region
    $region2: #{tpu_custom_call.1} parent=1 // pred_check
      _
    $region3: #{tpu_custom_call.1} parent=1 // pred_check_branch
      %17 = sbr.rel (0) target = $region5
    $region4: #{tpu_custom_call.1} parent=1 // pred_region
      %s19 = ssub.s32 256, 256
      %20 = vsyncadd [#allocation3], %s19
      %s21 = sshll.u32 [#allocation2], 4
      %s22 = int_to_ptr.vmem [resolvable:$true] %s21
      %27 = dma.hbm_to_vmem [thread:$0]  %s0, 256, %s22, [#allocation3], 128, 128, 8
    $region5: #{tpu_custom_call.1} parent=1 // pred_fallthru
      _
    // Predicated region
    $region6: #{tpu_custom_call.1} parent=1 // pred_check
      _
    $region7: #{tpu_custom_call.1} parent=1 // pred_check_branch
      %29 = sbr.rel (0) target = $region9
    $region8: #{tpu_custom_call.1} parent=1 // pred_region
      %s31 = ssub.s32 256, 256
      %32 = vsyncadd [#allocation6], %s31
      %s33 = sshll.u32 [#allocation5], 4
      %s34 = int_to_ptr.vmem [resolvable:$true] %s33
      %39 = dma.hbm_to_vmem [thread:$0]  %s1, 256, %s34, [#allocation6], 128, 128, 8
    $region9: #{tpu_custom_call.1} parent=1 // pred_fallthru
      _
    // Predicated region
    $region10: #{tpu_custom_call.1} parent=1 // pred_check
      _
    $region11: #{tpu_custom_call.1} parent=1 // pred_check_branch
      %41 = sbr.rel (0) target = $region13
    $region12: #{tpu_custom_call.1} parent=1 // pred_region
      _
    $region13: #{tpu_custom_call.1} parent=1 // pred_fallthru
      _
    // Predicated region
    $region14: #{tpu_custom_call.1} parent=1 // pred_check
      _
    $region15: #{tpu_custom_call.1} parent=1 // pred_check_branch
      %43 = sbr.rel (0) target = $region17
    $region16: #{tpu_custom_call.1} parent=1 // pred_region
      %s45 = ssub.s32 1024, 1024
      %46 = vsyncadd [#allocation6], %s45
      %s47 = sshll.u32 [#allocation7], 4
      %s48 = int_to_ptr.vmem [resolvable:$true] %s47
      %53 = dma.hbm_to_vmem [thread:$0]  %s3, 1024, %s48, [#allocation6], 128, 128, 8
    $region17: #{tpu_custom_call.1} parent=1 // pred_fallthru
      _
    // Predicated region
    $region18: #{tpu_custom_call.1} parent=1 // pred_check
      _
    $region19: #{tpu_custom_call.1} parent=1 // pred_check_branch
      %55 = sbr.rel (0) target = $region21
    $region20: #{tpu_custom_call.1} parent=1 // pred_region
      _
    $region21: #{tpu_custom_call.1} parent=1 // pred_fallthru
      _
    // Predicated region
    $region22: #{tpu_custom_call.1} parent=1 // pred_check
      _
    $region23: #{tpu_custom_call.1} parent=1 // pred_check_branch
      %57 = sbr.rel (0) target = $region25
    $region24: #{tpu_custom_call.1} parent=1 // pred_region
      %s59 = ssub.s32 1024, 1024
      %60 = vsyncadd [#allocation9], %s59
      %s61 = sshll.u32 [#allocation8], 4
      %s62 = int_to_ptr.vmem [resolvable:$true] %s61
      %67 = dma.hbm_to_vmem [thread:$0]  %s5, 1024, %s62, [#allocation9], 128, 128, 8
    $region25: #{tpu_custom_call.1} parent=1 // pred_fallthru
      _
    // Predicated region
    $region26: #{tpu_custom_call.1} parent=1 // pred_check
      _
    $region27: #{tpu_custom_call.1} parent=1 // pred_check_branch
      %69 = sbr.rel (0) target = $region29
    $region28: #{tpu_custom_call.1} parent=1 // pred_region
      _
    $region29: #{tpu_custom_call.1} parent=1 // pred_fallthru
      _
    // Predicated region
    $region30: #{tpu_custom_call.1} parent=1 // pred_check
      _
    $region31: #{tpu_custom_call.1} parent=1 // pred_check_branch
      %71 = sbr.rel (0) target = $region33
    $region32: #{tpu_custom_call.1} parent=1 // pred_region
      %72 = dma.done [#allocation3], 256
    $region33: #{tpu_custom_call.1} parent=1 // pred_fallthru
      _
    // Predicated region
    $region34: #{tpu_custom_call.1} parent=1 // pred_check
      _
    $region35: #{tpu_custom_call.1} parent=1 // pred_check_branch
      %74 = sbr.rel (0) target = $region37
    $region36: #{tpu_custom_call.1} parent=1 // pred_region
      %75 = dma.done [#allocation6], 256
    $region37: #{tpu_custom_call.1} parent=1 // pred_fallthru
      _
    // Predicated region
    $region38: #{tpu_custom_call.1} parent=1 // pred_check
      _
    $region39: #{tpu_custom_call.1} parent=1 // pred_check_branch
      %77 = sbr.rel (0) target = $region41
    $region40: #{tpu_custom_call.1} parent=1 // pred_region
      %78 = dma.done [#allocation6], 1024
    $region41: #{tpu_custom_call.1} parent=1 // pred_fallthru
      _
    // Predicated region
    $region42: #{tpu_custom_call.1} parent=1 // pred_check
      _
    $region43: #{tpu_custom_call.1} parent=1 // pred_check_branch
      %80 = sbr.rel (0) target = $region45
    $region44: #{tpu_custom_call.1} parent=1 // pred_region
      %81 = dma.done [#allocation9], 1024
    $region45: #{tpu_custom_call.1} parent=1 // pred_fallthru
      _
    %v82 = vld [vmem:[#allocation2] sm:$0xff]
    %v83 = vld [vmem:[#allocation2 + $0x8] sm:$0xff]
    %v84 = vld [vmem:[#allocation5] sm:$0xff]
    %v85 = vld [vmem:[#allocation5 + $0x8] sm:$0xff]
    %v86 = vld [vmem:[%s2] sm:$0x1]
    %v88 = vlaneseq
    %v89 = vshrl.u32 %v88, 7
    %v90 = vsub.s32 0, %v89
    %v91 = vrot.slane %v86, %v90
    %vm93 = vcmask 130048
    %v95 = vsel %vm93, %v82, 0
    %v98 = vsel %vm93, %v83, 0
    %100 = vmatprep.subr.mxu0 0.0
    %101 = vmatpush1.msra.mxu0 %v84
    %102 = vmatprep.subr.mxu0 0.0
    %103 = vmatpush1.msra.mxu0 %v85
    %104 = vmatprep.subr.mxu0 0.0
    %105 = vmatpush1.msra.mxu0 0.0
    %106 = vmatprep.subr.mxu0 0.0
    %107 = vmatpush1.msra.mxu0 0.0
    %108 = vmatprep.subr.mxu0 0.0
    %109 = vmatpush1.msra.mxu0 0.0
    %110 = vmatprep.subr.mxu0 0.0
    %111 = vmatpush1.msra.mxu0 0.0
    %112 = vmatprep.subr.mxu0 0.0
    %113 = vmatpush1.msra.mxu0 0.0
    %114 = vmatprep.subr.mxu0 0.0
    %115 = vmatpush1.msra.mxu0 0.0
    %116 = vmatprep.subr.mxu0 0.0
    %117 = vmatpush1.msra.mxu0 0.0
    %118 = vmatprep.subr.mxu0 0.0
    %119 = vmatpush1.msra.mxu0 0.0
    %120 = vmatprep.subr.mxu0 0.0
    %121 = vmatpush1.msra.mxu0 0.0
    %122 = vmatprep.subr.mxu0 0.0
    %123 = vmatpush1.msra.mxu0 0.0
    %124 = vmatprep.subr.mxu0 0.0
    %125 = vmatpush1.msra.mxu0 0.0
    %126 = vmatprep.subr.mxu0 0.0
    %127 = vmatpush1.msra.mxu0 0.0
    %128 = vmatprep.subr.mxu0 0.0
    %129 = vmatpush1.msra.mxu0 0.0
    %130 = vmatprep.subr.mxu0 0.0
    %131 = vmatpush1.msra.mxu0 0.0
    %132 = vmatprep.subr.mxu0 0.0
    %133 = vmatpush1.msra.mxu0 0.0
    %134 = vmatprep.subr.mxu0 0.0
    %135 = vmatpush1.msra.mxu0 0.0
    %136 = vmatprep.subr.mxu0 0.0
    %137 = vmatpush1.msra.mxu0 0.0
    %138 = vmatprep.subr.mxu0 0.0
    %139 = vmatpush1.msra.mxu0 0.0
    %140 = vmatprep.subr.mxu0 0.0
    %141 = vmatpush1.msra.mxu0 0.0
    %142 = vmatprep.subr.mxu0 0.0
    %143 = vmatpush1.msra.mxu0 0.0
    %144 = vmatprep.subr.mxu0 0.0
    %145 = vmatpush1.msra.mxu0 0.0
    %146 = vmatprep.subr.mxu0 0.0
    %147 = vmatpush1.msra.mxu0 0.0
    %148 = vmatprep.subr.mxu0 0.0
    %149 = vmatpush1.msra.mxu0 0.0
    %150 = vmatprep.subr.mxu0 0.0
    %151 = vmatpush1.msra.mxu0 0.0
    %152 = vmatprep.subr.mxu0 0.0
    %153 = vmatpush1.msra.mxu0 0.0
    %154 = vmatprep.subr.mxu0 0.0
    %155 = vmatpush1.msra.mxu0 0.0
    %156 = vmatprep.subr.mxu0 0.0
    %157 = vmatpush1.msra.mxu0 0.0
    %158 = vmatprep.subr.mxu0 0.0
    %159 = vmatpush1.msra.mxu0 0.0
    %160 = vmatprep.subr.mxu0 0.0
    %161 = vmatpush1.msra.mxu0 0.0
    %162 = vmatprep.subr.mxu0 0.0
    %163 = vmatpush1.msra.mxu0 0.0
    %164 = vmatprep.mubr.f32.mxu0 0.0
    %165 = vmatmul.mubr.f32.gmra.mrb[0].mxu0 %v95
    %v166 = vpop.f32.mrb[0].mxu0
    %v167 = vadd.f32 %v91, %v166
    %v168 = vpop.f32.mrb[0].mxu0
    %169 = vmatprep.mubr.f32.mxu0 0.0
    %170 = vmatmul.mubr.f32.gmra.mrb[0].mxu0 %v98
    %v171 = vpop.f32.mrb[0].mxu0
    %v172 = vadd.f32 %v91, %v171
    %v173 = vpop.f32.mrb[0].mxu0
    %174 = vdwg.mxu0
    %v175 = vtanh.pop %v167
    %v176 = vtanh.pop %v172
    %v177 = vld [vmem:[#allocation7] sm:$0xff]
    %v178 = vld [vmem:[#allocation7 + $0x8] sm:$0xff]
    %v179 = vld [vmem:[#allocation7 + $0x10] sm:$0xff]
    %v180 = vld [vmem:[#allocation7 + $0x18] sm:$0xff]
    %v181 = vld [vmem:[#allocation7 + $0x20] sm:$0xff]
    %v182 = vld [vmem:[#allocation7 + $0x28] sm:$0xff]
    %v183 = vld [vmem:[#allocation7 + $0x30] sm:$0xff]
    %v184 = vld [vmem:[#allocation7 + $0x38] sm:$0xff]
    %v185 = vld [vmem:[%s4] sm:$0x1]
    %v187 = vlaneseq
    %v188 = vshrl.u32 %v187, 7
    %v189 = vsub.s32 0, %v188
    %v190 = vrot.slane %v185, %v189
    %vm192 = vcmask 523264
    %v194 = vsel %vm192, %v175, 0
    %v197 = vsel %vm192, %v176, 0
    %199 = vmatprep.subr.mxu0 0.0
    %200 = vmatpush1.msra.mxu0 %v177
    %201 = vmatprep.subr.mxu0 0.0
    %202 = vmatpush1.msra.mxu0 %v178
    %203 = vmatprep.subr.mxu0 0.0
    %204 = vmatpush1.msra.mxu0 %v179
    %205 = vmatprep.subr.mxu0 0.0
    %206 = vmatpush1.msra.mxu0 %v180
    %207 = vmatprep.subr.mxu0 0.0
    %208 = vmatpush1.msra.mxu0 %v181
    %209 = vmatprep.subr.mxu0 0.0
    %210 = vmatpush1.msra.mxu0 %v182
    %211 = vmatprep.subr.mxu0 0.0
    %212 = vmatpush1.msra.mxu0 %v183
    %213 = vmatprep.subr.mxu0 0.0
    %214 = vmatpush1.msra.mxu0 %v184
    %215 = vmatprep.subr.mxu0 0.0
    %216 = vmatpush1.msra.mxu0 0.0
    %217 = vmatprep.subr.mxu0 0.0
    %218 = vmatpush1.msra.mxu0 0.0
    %219 = vmatprep.subr.mxu0 0.0
    %220 = vmatpush1.msra.mxu0 0.0
    %221 = vmatprep.subr.mxu0 0.0
    %222 = vmatpush1.msra.mxu0 0.0
    %223 = vmatprep.subr.mxu0 0.0
    %224 = vmatpush1.msra.mxu0 0.0
    %225 = vmatprep.subr.mxu0 0.0
    %226 = vmatpush1.msra.mxu0 0.0
    %227 = vmatprep.subr.mxu0 0.0
    %228 = vmatpush1.msra.mxu0 0.0
    %229 = vmatprep.subr.mxu0 0.0
    %230 = vmatpush1.msra.mxu0 0.0
    %231 = vmatprep.subr.mxu0 0.0
    %232 = vmatpush1.msra.mxu0 0.0
    %233 = vmatprep.subr.mxu0 0.0
    %234 = vmatpush1.msra.mxu0 0.0
    %235 = vmatprep.subr.mxu0 0.0
    %236 = vmatpush1.msra.mxu0 0.0
    %237 = vmatprep.subr.mxu0 0.0
    %238 = vmatpush1.msra.mxu0 0.0
    %239 = vmatprep.subr.mxu0 0.0
    %240 = vmatpush1.msra.mxu0 0.0
    %241 = vmatprep.subr.mxu0 0.0
    %242 = vmatpush1.msra.mxu0 0.0
    %243 = vmatprep.subr.mxu0 0.0
    %244 = vmatpush1.msra.mxu0 0.0
    %245 = vmatprep.subr.mxu0 0.0
    %246 = vmatpush1.msra.mxu0 0.0
    %247 = vmatprep.subr.mxu0 0.0
    %248 = vmatpush1.msra.mxu0 0.0
    %249 = vmatprep.subr.mxu0 0.0
    %250 = vmatpush1.msra.mxu0 0.0
    %251 = vmatprep.subr.mxu0 0.0
    %252 = vmatpush1.msra.mxu0 0.0
    %253 = vmatprep.subr.mxu0 0.0
    %254 = vmatpush1.msra.mxu0 0.0
    %255 = vmatprep.subr.mxu0 0.0
    %256 = vmatpush1.msra.mxu0 0.0
    %257 = vmatprep.subr.mxu0 0.0
    %258 = vmatpush1.msra.mxu0 0.0
    %259 = vmatprep.subr.mxu0 0.0
    %260 = vmatpush1.msra.mxu0 0.0
    %261 = vmatprep.subr.mxu0 0.0
    %262 = vmatpush1.msra.mxu0 0.0
    %263 = vmatprep.mubr.f32.mxu0 0.0
    %264 = vmatmul.mubr.f32.gmra.mrb[0].mxu0 %v194
    %v265 = vpop.f32.mrb[0].mxu0
    %v266 = vadd.f32 %v190, %v265
    %v267 = vpop.f32.mrb[0].mxu0
    %268 = vmatprep.mubr.f32.mxu0 0.0
    %269 = vmatmul.mubr.f32.gmra.mrb[0].mxu0 %v197
    %v270 = vpop.f32.mrb[0].mxu0
    %v271 = vadd.f32 %v190, %v270
    %v272 = vpop.f32.mrb[0].mxu0
    %273 = vdwg.mxu0
    %v274 = vtanh.pop %v266
    %v275 = vtanh.pop %v271
    %v276 = vld [vmem:[#allocation8] sm:$0xff]
    %v277 = vld [vmem:[#allocation8 + $0x8] sm:$0xff]
    %v278 = vld [vmem:[#allocation8 + $0x10] sm:$0xff]
    %v279 = vld [vmem:[#allocation8 + $0x18] sm:$0xff]
    %v280 = vld [vmem:[#allocation8 + $0x20] sm:$0xff]
    %v281 = vld [vmem:[#allocation8 + $0x28] sm:$0xff]
    %v282 = vld [vmem:[#allocation8 + $0x30] sm:$0xff]
    %v283 = vld [vmem:[#allocation8 + $0x38] sm:$0xff]
    %v284 = vld [vmem:[%s6] sm:$0x1]
    %v286 = vlaneseq
    %v287 = vshrl.u32 %v286, 7
    %v288 = vsub.s32 0, %v287
    %v289 = vrot.slane %v284, %v288
    %v292 = vsel %vm192, %v274, 0
    %v295 = vsel %vm192, %v275, 0
    %297 = vmatprep.subr.mxu0 0.0
    %298 = vmatpush1.msra.mxu0 %v276
    %299 = vmatprep.subr.mxu0 0.0
    %300 = vmatpush1.msra.mxu0 %v277
    %301 = vmatprep.subr.mxu0 0.0
    %302 = vmatpush1.msra.mxu0 %v278
    %303 = vmatprep.subr.mxu0 0.0
    %304 = vmatpush1.msra.mxu0 %v279
    %305 = vmatprep.subr.mxu0 0.0
    %306 = vmatpush1.msra.mxu0 %v280
    %307 = vmatprep.subr.mxu0 0.0
    %308 = vmatpush1.msra.mxu0 %v281
    %309 = vmatprep.subr.mxu0 0.0
    %310 = vmatpush1.msra.mxu0 %v282
    %311 = vmatprep.subr.mxu0 0.0
    %312 = vmatpush1.msra.mxu0 %v283
    %313 = vmatprep.subr.mxu0 0.0
    %314 = vmatpush1.msra.mxu0 0.0
    %315 = vmatprep.subr.mxu0 0.0
    %316 = vmatpush1.msra.mxu0 0.0
    %317 = vmatprep.subr.mxu0 0.0
    %318 = vmatpush1.msra.mxu0 0.0
    %319 = vmatprep.subr.mxu0 0.0
    %320 = vmatpush1.msra.mxu0 0.0
    %321 = vmatprep.subr.mxu0 0.0
    %322 = vmatpush1.msra.mxu0 0.0
    %323 = vmatprep.subr.mxu0 0.0
    %324 = vmatpush1.msra.mxu0 0.0
    %325 = vmatprep.subr.mxu0 0.0
    %326 = vmatpush1.msra.mxu0 0.0
    %327 = vmatprep.subr.mxu0 0.0
    %328 = vmatpush1.msra.mxu0 0.0
    %329 = vmatprep.subr.mxu0 0.0
    %330 = vmatpush1.msra.mxu0 0.0
    %331 = vmatprep.subr.mxu0 0.0
    %332 = vmatpush1.msra.mxu0 0.0
    %333 = vmatprep.subr.mxu0 0.0
    %334 = vmatpush1.msra.mxu0 0.0
    %335 = vmatprep.subr.mxu0 0.0
    %336 = vmatpush1.msra.mxu0 0.0
    %337 = vmatprep.subr.mxu0 0.0
    %338 = vmatpush1.msra.mxu0 0.0
    %339 = vmatprep.subr.mxu0 0.0
    %340 = vmatpush1.msra.mxu0 0.0
    %341 = vmatprep.subr.mxu0 0.0
    %342 = vmatpush1.msra.mxu0 0.0
    %343 = vmatprep.subr.mxu0 0.0
    %344 = vmatpush1.msra.mxu0 0.0
    %345 = vmatprep.subr.mxu0 0.0
    %346 = vmatpush1.msra.mxu0 0.0
    %347 = vmatprep.subr.mxu0 0.0
    %348 = vmatpush1.msra.mxu0 0.0
    %349 = vmatprep.subr.mxu0 0.0
    %350 = vmatpush1.msra.mxu0 0.0
    %351 = vmatprep.subr.mxu0 0.0
    %352 = vmatpush1.msra.mxu0 0.0
    %353 = vmatprep.subr.mxu0 0.0
    %354 = vmatpush1.msra.mxu0 0.0
    %355 = vmatprep.subr.mxu0 0.0
    %356 = vmatpush1.msra.mxu0 0.0
    %357 = vmatprep.subr.mxu0 0.0
    %358 = vmatpush1.msra.mxu0 0.0
    %359 = vmatprep.subr.mxu0 0.0
    %360 = vmatpush1.msra.mxu0 0.0
    %361 = vmatprep.mubr.f32.mxu0 0.0
    %362 = vmatmul.mubr.f32.gmra.mrb[0].mxu0 %v292
    %v363 = vpop.f32.mrb[0].mxu0
    %v364 = vadd.f32 %v289, %v363
    %v365 = vpop.f32.mrb[0].mxu0
    %366 = vmatprep.mubr.f32.mxu0 0.0
    %367 = vmatmul.mubr.f32.gmra.mrb[0].mxu0 %v295
    %v368 = vpop.f32.mrb[0].mxu0
    %v369 = vadd.f32 %v289, %v368
    %v370 = vpop.f32.mrb[0].mxu0
    %371 = vdwg.mxu0
    %372 = vmax.xlane.f32.xlu0 %v364
    %v373 = vpop.xlane.xlu0 %372
    %374 = vmax.xlane.f32.xlu0 %v369
    %v375 = vpop.xlane.xlu0 %374
    %v376 = vsub.f32 %v364, %v373
    %v377 = vsub.f32 %v369, %v375
    %v378 = vmul.f32 %v376, 1.442695
    %v379 = vpow.pop %v378
    %v380 = vmul.f32 %v377, 1.442695
    %v381 = vpow.pop %v380
    %382 = vadd.xlane.f32.xlu0 %v379
    %v383 = vpop.xlane.xlu0 %382
    %384 = vadd.xlane.f32.xlu0 %v381
    %v385 = vpop.xlane.xlu0 %384
    %v386 = vrcp.pop %v383
    %v387 = vrcp.pop %v385
    %v388 = vmul.f32 %v379, %v386
    %v389 = vmul.f32 %v381, %v387
    %390 = vst [vmem:[#allocation10] sm:$0xff] %v388
    %391 = vst [vmem:[#allocation10 + $0x8] sm:$0xff] %v389
    // Predicated region
    $region46: #{tpu_custom_call.1} parent=1 // pred_check
      _
    $region47: #{tpu_custom_call.1} parent=1 // pred_check_branch
      %393 = sbr.rel (0) target = $region49
    $region48: #{tpu_custom_call.1} parent=1 // pred_region
      %s395 = ssub.s32 256, 256
      %396 = vsyncadd [#allocation4], %s395
      %s397 = sshll.u32 [#allocation10], 4
      %s398 = int_to_ptr.vmem [resolvable:$true] %s397
      %403 = dma.vmem_to_hbm [thread:$0]  %s398, 256, %s7, [#allocation4], 128, 128, 8
    $region49: #{tpu_custom_call.1} parent=1 // pred_fallthru
      _
    // Predicated region
    $region50: #{tpu_custom_call.1} parent=1 // pred_check
      _
    $region51: #{tpu_custom_call.1} parent=1 // pred_check_branch
      %405 = sbr.rel (0) target = $region53
    $region52: #{tpu_custom_call.1} parent=1 // pred_region
      %406 = dma.done [#allocation4], 256
    $region53: #{tpu_custom_call.1} parent=1 // pred_fallthru
      _
    %407 = vsyncpa [#allocation3], 1
    %408 = vsyncpa [#allocation6], 1
    %409 = vsyncpa [#allocation9], 1
    %410 = vsyncpa [#allocation4], 1

</llo_original>
